<compile_context>
chip_gen: v7x
topology: tpu7x:2x2x1
jax: 0.10.0
libtpu: 0.0.40
codegen_flags: <defaults>
</compile_context>

<pallas_src>
import functools

import jax
import jax.numpy as jnp
from jax import lax
from jax.experimental import pallas as pl
from jax.experimental.pallas import tpu as pltpu


def _round_up(x, m):
    return ((x + m - 1) // m) * m


def _bev_segm_kernel(W, T, halo, HW,
                     mask_ref, w1_ref, bnb_ref, w2_ref, b2_ref, x_hbm,
                     out_ref, xflat_ref, col_ref, sems):
    """One (batch, row-strip) tile per grid step.

    mask_ref : (2, T)        bf16  [not-first-col ; not-last-col] lane masks
    w1_ref   : (Cmid, 9*Cin) bf16  3x3 weights, tap-major K, BN scale folded in
    bnb_ref  : (Cmid, 1)     f32   folded BN bias (beta - mean*scale)
    w2_ref   : (Ncls, Cmid)  bf16  1x1 weights
    b2_ref   : (Ncls, 1)     f32   1x1 bias
    x_hbm    : (B, Cin, H*W) bf16  activation, left in HBM (memory_space=ANY)
    out_ref  : (1, Ncls, T)  f32   lane-dense output strip
    xflat_ref: (Cin, halo+T+halo) bf16  flat strip + vertical-halo scratch
    col_ref  : (9*Cin, T)    bf16  strip-local im2col scratch
    sems     : (3,)          DMA semaphores (top halo / strip body / bot halo)
    """
    cin = xflat_ref.shape[0]
    b = pl.program_id(0)
    s = pl.program_id(1)
    n_strips = pl.num_programs(1)

    # Flat start of this strip; all offsets below are multiples of 128 by
    # construction (T, halo and HW are multiples of 128).
    p0 = pl.multiple_of(s * T, 128)

    # --- HBM -> VMEM DMAs: strip body + flat top/bottom halos ---------------
    # Frame-boundary strips fetch a clamped (always in-bounds) dummy halo that
    # is overwritten with zeros after the wait; this keeps every DMA
    # unconditional and fixed-size, so starts and waits always pair up.
    top_src = pl.multiple_of(jnp.maximum(p0 - halo, 0), 128)
    bot_src = pl.multiple_of(jnp.minimum(p0 + T, HW - halo), 128)
    cp_top = pltpu.make_async_copy(x_hbm.at[b, :, pl.ds(top_src, halo)],
                                   xflat_ref.at[:, 0:halo], sems.at[0])
    cp_mid = pltpu.make_async_copy(x_hbm.at[b, :, pl.ds(p0, T)],
                                   xflat_ref.at[:, halo:halo + T], sems.at[1])
    cp_bot = pltpu.make_async_copy(x_hbm.at[b, :, pl.ds(bot_src, halo)],
                                   xflat_ref.at[:, halo + T:halo + T + halo],
                                   sems.at[2])
    cp_top.start()
    cp_mid.start()
    cp_bot.start()
    cp_top.wait()
    cp_mid.wait()
    cp_bot.wait()
    # TODO(synk): a 2-deep manual prefetch of the next strip would hide this
    # DMA latency but requires the strip axis to be "arbitrary"; we keep it
    # "parallel" for v7x megacore instead (DMA is a small fraction of the
    # strip's MXU time at production shapes).

    # Zero ONLY the vertical-halo slabs, and only at the frame top / bottom
    # (interior strips get real neighbour rows; the body is fully overwritten
    # by the DMA every step, so there is no full-scratch memset).
    @pl.when(s == 0)
    def _():
        xflat_ref[:, 0:halo] = jnp.zeros((cin, halo), xflat_ref.dtype)

    @pl.when(s == n_strips - 1)
    def _():
        xflat_ref[:, halo + T:halo + T + halo] = jnp.zeros((cin, halo),
                                                           xflat_ref.dtype)

    # --- strip-local im2col (9*Cin, T), tap-major rows -----------------------
    # Each tap is a static lane-window of the flat halo'd strip; the hoisted
    # column masks zero the dx=+-1 taps that would wrap across row ends.
    m_left = mask_ref[0:1, :]      # 1.0 where output column > 0     (dx = -1)
    m_right = mask_ref[1:2, :]     # 1.0 where output column < W - 1 (dx = +1)
    for ky in range(3):
        for kx in range(3):
            dy, dx = ky - 1, kx - 1
            start = halo + dy * W + dx                 # static Python int
            patch = xflat_ref[:, start:start + T]      # (Cin, T) bf16
            if dx == -1:
                patch = patch * m_left
            elif dx == 1:
                patch = patch * m_right
            tap = ky * 3 + kx
            col_ref[tap * cin:(tap + 1) * cin, :] = patch
    # TODO(synk): on v5e (128-deep MXU) 9 accumulating K=Cin dots with no col
    # staging are the better structure; a single K=9*Cin dot is the right
    # shape for the 256-deep v6e/v7x MXU (~90% K occupancy at Cin=128).

    # --- 3x3 conv (+ folded BN scale) as ONE MXU matmul, f32 accumulation ---
    acc = jnp.dot(w1_ref[...], col_ref[...],
                  preferred_element_type=jnp.float32)          # (Cmid, T)
    feat = jnp.maximum(acc + bnb_ref[...], 0.0)                # BN bias + ReLU

    # --- 1x1 conv + bias, fused per strip (feat never exists full-frame) ----
    out = jnp.dot(w2_ref[...], feat.astype(w2_ref.dtype),
                  preferred_element_type=jnp.float32) + b2_ref[...]
    out_ref[0] = out


@functools.partial(jax.jit, static_argnames=("strip_rows", "eps"))
def bev_segm_head_forward(bev_feat, conv1_w, bn_gamma, bn_beta, bn_mean,
                          bn_var, conv2_w, conv2_b, *, strip_rows=None,
                          eps=1e-5):
    """Equivalent of BEVSegmHead.forward (with_depth_supervised=False).

    bev_feat: (B, Cin, H, W) f32 NCHW activation (the layout PyTorch provides)
    conv1_w : (Cmid, Cin, 3, 3)   3x3 conv weight (no bias)
    bn_*    : (Cmid,)             eval-mode BatchNorm parameters
    conv2_w : (Ncls, Cmid, 1, 1)  1x1 conv weight
    conv2_b : (Ncls,)             1x1 conv bias
    Returns (out, None) with out: (B, Ncls, H, W) f32.
    """
    B, Cin, H, W = bev_feat.shape
    Cmid = conv1_w.shape[0]
    Ncls = conv2_w.shape[0]
    HW = H * W
    halo = _round_up(W + 1, 128)      # flat vertical halo, lane-aligned

    # --- row-strip tiling.  The auto-pick keeps the strip working set modest
    # (sized for v7x's 64 MiB VMEM); v5e/v6e can take ~2-4x larger strips. ---
    if strip_rows is None:
        cands = [sh for sh in range(1, H + 1)
                 if H % sh == 0 and (sh * W) % 128 == 0]
        assert cands, "pick H, W so some row strip is a multiple of 128 lanes"

        def _strip_bytes(sh):         # xflat + col (bf16) + f32 feat
            t = sh * W
            return 2 * Cin * (t + 2 * halo) + 2 * 9 * Cin * t + 4 * Cmid * t

        good = [sh for sh in cands if _strip_bytes(sh) <= 8 * 1024 * 1024]
        strip_rows = max(good) if good else min(cands)

    assert H % strip_rows == 0, "strip_rows must divide H"
    n_strips = H // strip_rows
    T = strip_rows * W                # lanes per strip (output block width)
    assert T % 128 == 0, "strip width must be a multiple of 128 lanes"
    assert halo <= T, "strip must be at least one (lane-rounded) halo wide"

    # --- fold BatchNorm scale into the 3x3 weights (wrapper-side, free) -----
    scale = bn_gamma / jnp.sqrt(bn_var + eps)
    # (Cmid, Cin, 3, 3) -> (Cmid, ky, kx, Cin) -> (Cmid, 9*Cin): K index is
    # tap*Cin + c with tap = ky*3 + kx, matching the in-kernel im2col order.
    w1f = (conv1_w * scale[:, None, None, None]).transpose(0, 2, 3, 1)
    w1f = w1f.reshape(Cmid, 9 * Cin).astype(jnp.bfloat16)
    bnb = (bn_beta - bn_mean * scale).reshape(Cmid, 1).astype(jnp.float32)
    w2f = conv2_w.reshape(Ncls, Cmid).astype(jnp.bfloat16)
    b2f = conv2_b.reshape(Ncls, 1).astype(jnp.float32)

    # NCHW -> (B, Cin, H*W) is a free reshape; bf16 halves the activation DMA.
    # It stays in HBM (memory_space=ANY): the kernel DMAs each strip + halo
    # directly into its flat scratch, so there is no BlockSpec double-buffered
    # copy of x and no VMEM->VMEM staging pass.
    x = bev_feat.reshape(B, Cin, HW).astype(jnp.bfloat16)

    # Hoisted column masks (identical for every strip since T % W == 0).
    wpos = jnp.arange(T, dtype=jnp.int32) % W
    colmask = jnp.stack([wpos != 0, wpos != W - 1]).astype(jnp.bfloat16)

    kernel = functools.partial(_bev_segm_kernel, W, T, halo, HW)

    out_flat = pl.pallas_call(
        kernel,
        out_shape=jax.ShapeDtypeStruct((B, Ncls, HW), jnp.float32),
        grid_spec=pltpu.PrefetchScalarGridSpec(
            num_scalar_prefetch=0,
            grid=(B, n_strips),
            in_specs=[
                # TODO(synk): these constant operands could be single-buffered
                # (pipeline_mode=pl.Buffered(1)) to trim VMEM once Cin=128.
                pl.BlockSpec((2, T), lambda b, s: (0, 0)),
                pl.BlockSpec((Cmid, 9 * Cin), lambda b, s: (0, 0)),
                pl.BlockSpec((Cmid, 1), lambda b, s: (0, 0)),
                pl.BlockSpec((Ncls, Cmid), lambda b, s: (0, 0)),
                pl.BlockSpec((Ncls, 1), lambda b, s: (0, 0)),
                pl.BlockSpec(memory_space=pl.ANY),     # x: raw HBM ref
            ],
            out_specs=pl.BlockSpec((1, Ncls, T), lambda b, s: (b, 0, s)),
            scratch_shapes=[
                pltpu.VMEM((Cin, halo + T + halo), jnp.bfloat16),  # strip+halo
                pltpu.VMEM((9 * Cin, T), jnp.bfloat16),            # im2col
                pltpu.SemaphoreType.DMA((3,)),
            ],
        ),
        compiler_params=pltpu.CompilerParams(
            # batch AND strip parallel: keeps v7x's two TensorCores busy even
            # at B = 1; harmless on the single-core v5e/v6e.
            dimension_semantics=("parallel", "parallel"),
            vmem_limit_bytes=32 * 1024 * 1024,
        ),
    )(colmask, w1f, bnb, w2f, b2f, x)

    # (B, Ncls, H*W) -> (B, Ncls, H, W): free reshape (already NCHW order).
    out = out_flat.reshape(B, Ncls, H, W)
    # TODO(synk): the depth-supervised variant only passes bev_feat['depths']
    # through (no compute); we return None like the non-supervised path.
    return out, None


def _reference_forward(x, conv1_w, bn_gamma, bn_beta, bn_mean, bn_var,
                       conv2_w, conv2_b, *, eps=1e-5):
    """Pure-JAX f32 reference (lax.conv) of the module semantics."""
    y = lax.conv_general_dilated(
        x, conv1_w, window_strides=(1, 1), padding="SAME",
        dimension_numbers=("NCHW", "OIHW", "NCHW"),
        precision=lax.Precision.HIGHEST)
    scale = bn_gamma / jnp.sqrt(bn_var + eps)
    y = y * scale[None, :, None, None] + (bn_beta - bn_mean * scale)[None, :, None, None]
    y = jnp.maximum(y, 0.0)
    out = lax.conv_general_dilated(
        y, conv2_w, window_strides=(1, 1), padding="SAME",
        dimension_numbers=("NCHW", "OIHW", "NCHW"),
        precision=lax.Precision.HIGHEST)
    return out + conv2_b[None, :, None, None]


if __name__ == "__main__":
    # Small shapes consistent with the module: input_channel=16, n_classes=3
    # (unique target_maps), BEV grid 16x16, batch 2.
    B, Cin, H, W = 2, 16, 16, 16
    Cmid = Cin        # SimpleConvEncoder(input_channel, input_channel, n_cls)
    Ncls = 3

    key = jax.random.PRNGKey(0)
    k_x, k_w1, k_g, k_b, k_m, k_v, k_w2, k_b2 = jax.random.split(key, 8)

    bev_feat = jax.random.normal(k_x, (B, Cin, H, W), dtype=jnp.float32)
    conv1_w = (jax.random.normal(k_w1, (Cmid, Cin, 3, 3), dtype=jnp.float32)
               * (1.0 / jnp.sqrt(9.0 * Cin)))
    bn_gamma = 1.0 + 0.1 * jax.random.normal(k_g, (Cmid,), dtype=jnp.float32)
    bn_beta = 0.1 * jax.random.normal(k_b, (Cmid,), dtype=jnp.float32)
    bn_mean = 0.1 * jax.random.normal(k_m, (Cmid,), dtype=jnp.float32)
    bn_var = jnp.abs(1.0 + 0.1 * jax.random.normal(k_v, (Cmid,),
                                                   dtype=jnp.float32))
    conv2_w = (jax.random.normal(k_w2, (Ncls, Cmid, 1, 1), dtype=jnp.float32)
               * (1.0 / jnp.sqrt(1.0 * Cmid)))
    conv2_b = 0.01 * jax.random.normal(k_b2, (Ncls,), dtype=jnp.float32)

    ref = jax.block_until_ready(_reference_forward(
        bev_feat, conv1_w, bn_gamma, bn_beta, bn_mean, bn_var,
        conv2_w, conv2_b))

    # Exercise both the multi-strip path (halo rows DMA'd from the neighbour
    # strip) and the single-strip path (both halos zeroed).
    for strip_rows in (8, 16):
        out, depth = bev_segm_head_forward(
            bev_feat, conv1_w, bn_gamma, bn_beta, bn_mean, bn_var,
            conv2_w, conv2_b, strip_rows=strip_rows)
        out = jax.block_until_ready(out)
        assert depth is None
        assert out.shape == (B, Ncls, H, W), out.shape
        # bf16 MXU operands (f32 accumulation) vs an f32 reference -> relaxed
        # tolerance (expected max abs err ~1e-2 at these magnitudes).
        err = float(jnp.max(jnp.abs(out - ref)))
        assert err < 1e-1, f"strip_rows={strip_rows}: max abs err {err}"

    print("KERNEL_OK")
</pallas_src>

<mosaic_0001>
module attributes {stable_mosaic.version = 11 : i64} {
  func.func @_bev_segm_kernel(%arg0: i32, %arg1: i32, %arg2: memref<2x128xbf16, #tpu.memory_space<vmem>>, %arg3: memref<16x144xbf16, #tpu.memory_space<vmem>>, %arg4: memref<16x1xf32, #tpu.memory_space<vmem>>, %arg5: memref<3x16xbf16, #tpu.memory_space<vmem>>, %arg6: memref<3x1xf32, #tpu.memory_space<vmem>>, %arg7: memref<2x16x256xbf16, #tpu.memory_space<any>>, %arg8: memref<1x3x128xf32, #tpu.memory_space<vmem>>, %arg9: memref<16x384xbf16, #tpu.memory_space<vmem>>, %arg10: memref<144x128xbf16, #tpu.memory_space<vmem>>, %arg11: memref<3x!tpu.dma_semaphore, #tpu.memory_space<semaphore_mem>>) attributes {dimension_semantics = [#tpu.dimension_semantics<parallel>, #tpu.dimension_semantics<parallel>], iteration_bounds = array<i64: 2, 2>, scalar_prefetch = 0 : i64, scratch_operands = 3 : i64, tpu.core_type = #tpu.core_type<tc>, window_params = [{pipeline_mode = #tpu.pipeline_mode<synchronous>, transform_indices = @transform_0, window_bounds = array<i64: 2, 128>}, {pipeline_mode = #tpu.pipeline_mode<synchronous>, transform_indices = @transform_1, window_bounds = array<i64: 16, 144>}, {pipeline_mode = #tpu.pipeline_mode<synchronous>, transform_indices = @transform_2, window_bounds = array<i64: 16, 1>}, {pipeline_mode = #tpu.pipeline_mode<synchronous>, transform_indices = @transform_3, window_bounds = array<i64: 3, 16>}, {pipeline_mode = #tpu.pipeline_mode<synchronous>, transform_indices = @transform_4, window_bounds = array<i64: 3, 1>}, {}, {transform_indices = @transform_6, window_bounds = array<i64: 1, 3, 128>}]} {
    %c128_i32 = arith.constant 128 : i32
    %0 = arith.muli %arg1, %c128_i32 : i32
    %1 = tpu.assume_multiple %0, 128 : i32
    %c128_i32_0 = arith.constant 128 : i32
    %2 = arith.subi %1, %c128_i32_0 : i32
    %c0_i32 = arith.constant 0 : i32
    %3 = arith.maxsi %2, %c0_i32 : i32
    %4 = tpu.assume_multiple %3, 128 : i32
    %c128_i32_1 = arith.constant 128 : i32
    %5 = arith.addi %1, %c128_i32_1 : i32
    %c128_i32_2 = arith.constant 128 : i32
    %6 = arith.minsi %5, %c128_i32_2 : i32
    %7 = tpu.assume_multiple %6, 128 : i32
    %c0_i32_3 = arith.constant 0 : i32
    %c0_i32_4 = arith.constant 0 : i32
    %8 = tpu.memref_slice %arg7[%arg0, %c0_i32_4, %4] : memref<2x16x256xbf16, #tpu.memory_space<any>> -> memref<1x16x128xbf16, #tpu.memory_space<any>>
    %9 = tpu.memref_squeeze %8 : memref<1x16x128xbf16, #tpu.memory_space<any>> -> memref<16x128xbf16, #tpu.memory_space<any>>
    %c0_i32_5 = arith.constant 0 : i32
    %c0_i32_6 = arith.constant 0 : i32
    %10 = tpu.memref_slice %arg9[%c0_i32_5, %c0_i32_6] : memref<16x384xbf16, #tpu.memory_space<vmem>> -> memref<16x128xbf16, #tpu.memory_space<vmem>>
    %11 = tpu.memref_slice %arg11[%c0_i32_3] : memref<3x!tpu.dma_semaphore, #tpu.memory_space<semaphore_mem>> -> memref<1x!tpu.dma_semaphore, #tpu.memory_space<semaphore_mem>>
    %12 = tpu.memref_squeeze %11 : memref<1x!tpu.dma_semaphore, #tpu.memory_space<semaphore_mem>> -> memref<!tpu.dma_semaphore, #tpu.memory_space<semaphore_mem>>
    tpu.enqueue_dma source(%9 : memref<16x128xbf16, #tpu.memory_space<any>>) target(%10 : memref<16x128xbf16, #tpu.memory_space<vmem>>) target_semaphore(%12 : memref<!tpu.dma_semaphore, #tpu.memory_space<semaphore_mem>>)
    %c1_i32 = arith.constant 1 : i32
    %c0_i32_7 = arith.constant 0 : i32
    %13 = tpu.memref_slice %arg7[%arg0, %c0_i32_7, %1] : memref<2x16x256xbf16, #tpu.memory_space<any>> -> memref<1x16x128xbf16, #tpu.memory_space<any>>
    %14 = tpu.memref_squeeze %13 : memref<1x16x128xbf16, #tpu.memory_space<any>> -> memref<16x128xbf16, #tpu.memory_space<any>>
    %c0_i32_8 = arith.constant 0 : i32
    %c128_i32_9 = arith.constant 128 : i32
    %15 = tpu.memref_slice %arg9[%c0_i32_8, %c128_i32_9] : memref<16x384xbf16, #tpu.memory_space<vmem>> -> memref<16x128xbf16, #tpu.memory_space<vmem>>
    %16 = tpu.memref_slice %arg11[%c1_i32] : memref<3x!tpu.dma_semaphore, #tpu.memory_space<semaphore_mem>> -> memref<1x!tpu.dma_semaphore, #tpu.memory_space<semaphore_mem>>
    %17 = tpu.memref_squeeze %16 : memref<1x!tpu.dma_semaphore, #tpu.memory_space<semaphore_mem>> -> memref<!tpu.dma_semaphore, #tpu.memory_space<semaphore_mem>>
    tpu.enqueue_dma source(%14 : memref<16x128xbf16, #tpu.memory_space<any>>) target(%15 : memref<16x128xbf16, #tpu.memory_space<vmem>>) target_semaphore(%17 : memref<!tpu.dma_semaphore, #tpu.memory_space<semaphore_mem>>)
    %c2_i32 = arith.constant 2 : i32
    %c0_i32_10 = arith.constant 0 : i32
    %18 = tpu.memref_slice %arg7[%arg0, %c0_i32_10, %7] : memref<2x16x256xbf16, #tpu.memory_space<any>> -> memref<1x16x128xbf16, #tpu.memory_space<any>>
    %19 = tpu.memref_squeeze %18 : memref<1x16x128xbf16, #tpu.memory_space<any>> -> memref<16x128xbf16, #tpu.memory_space<any>>
    %c0_i32_11 = arith.constant 0 : i32
    %c256_i32 = arith.constant 256 : i32
    %20 = tpu.memref_slice %arg9[%c0_i32_11, %c256_i32] : memref<16x384xbf16, #tpu.memory_space<vmem>> -> memref<16x128xbf16, #tpu.memory_space<vmem>>
    %21 = tpu.memref_slice %arg11[%c2_i32] : memref<3x!tpu.dma_semaphore, #tpu.memory_space<semaphore_mem>> -> memref<1x!tpu.dma_semaphore, #tpu.memory_space<semaphore_mem>>
    %22 = tpu.memref_squeeze %21 : memref<1x!tpu.dma_semaphore, #tpu.memory_space<semaphore_mem>> -> memref<!tpu.dma_semaphore, #tpu.memory_space<semaphore_mem>>
    tpu.enqueue_dma source(%19 : memref<16x128xbf16, #tpu.memory_space<any>>) target(%20 : memref<16x128xbf16, #tpu.memory_space<vmem>>) target_semaphore(%22 : memref<!tpu.dma_semaphore, #tpu.memory_space<semaphore_mem>>)
    %c0_i32_12 = arith.constant 0 : i32
    %c0_i32_13 = arith.constant 0 : i32
    %23 = tpu.memref_slice %arg7[%arg0, %c0_i32_13, %4] : memref<2x16x256xbf16, #tpu.memory_space<any>> -> memref<1x16x128xbf16, #tpu.memory_space<any>>
    %24 = tpu.memref_squeeze %23 : memref<1x16x128xbf16, #tpu.memory_space<any>> -> memref<16x128xbf16, #tpu.memory_space<any>>
    %c0_i32_14 = arith.constant 0 : i32
    %c0_i32_15 = arith.constant 0 : i32
    %25 = tpu.memref_slice %arg9[%c0_i32_14, %c0_i32_15] : memref<16x384xbf16, #tpu.memory_space<vmem>> -> memref<16x128xbf16, #tpu.memory_space<vmem>>
    %26 = tpu.memref_slice %arg11[%c0_i32_12] : memref<3x!tpu.dma_semaphore, #tpu.memory_space<semaphore_mem>> -> memref<1x!tpu.dma_semaphore, #tpu.memory_space<semaphore_mem>>
    %27 = tpu.memref_squeeze %26 : memref<1x!tpu.dma_semaphore, #tpu.memory_space<semaphore_mem>> -> memref<!tpu.dma_semaphore, #tpu.memory_space<semaphore_mem>>
    tpu.wait_dma2 semaphore(%27 : memref<!tpu.dma_semaphore, #tpu.memory_space<semaphore_mem>>) src(%24 : memref<16x128xbf16, #tpu.memory_space<any>>) dst(%25 : memref<16x128xbf16, #tpu.memory_space<vmem>>)
    %c1_i32_16 = arith.constant 1 : i32
    %c0_i32_17 = arith.constant 0 : i32
    %28 = tpu.memref_slice %arg7[%arg0, %c0_i32_17, %1] : memref<2x16x256xbf16, #tpu.memory_space<any>> -> memref<1x16x128xbf16, #tpu.memory_space<any>>
    %29 = tpu.memref_squeeze %28 : memref<1x16x128xbf16, #tpu.memory_space<any>> -> memref<16x128xbf16, #tpu.memory_space<any>>
    %c0_i32_18 = arith.constant 0 : i32
    %c128_i32_19 = arith.constant 128 : i32
    %30 = tpu.memref_slice %arg9[%c0_i32_18, %c128_i32_19] : memref<16x384xbf16, #tpu.memory_space<vmem>> -> memref<16x128xbf16, #tpu.memory_space<vmem>>
    %31 = tpu.memref_slice %arg11[%c1_i32_16] : memref<3x!tpu.dma_semaphore, #tpu.memory_space<semaphore_mem>> -> memref<1x!tpu.dma_semaphore, #tpu.memory_space<semaphore_mem>>
    %32 = tpu.memref_squeeze %31 : memref<1x!tpu.dma_semaphore, #tpu.memory_space<semaphore_mem>> -> memref<!tpu.dma_semaphore, #tpu.memory_space<semaphore_mem>>
    tpu.wait_dma2 semaphore(%32 : memref<!tpu.dma_semaphore, #tpu.memory_space<semaphore_mem>>) src(%29 : memref<16x128xbf16, #tpu.memory_space<any>>) dst(%30 : memref<16x128xbf16, #tpu.memory_space<vmem>>)
    %c2_i32_20 = arith.constant 2 : i32
    %c0_i32_21 = arith.constant 0 : i32
    %33 = tpu.memref_slice %arg7[%arg0, %c0_i32_21, %7] : memref<2x16x256xbf16, #tpu.memory_space<any>> -> memref<1x16x128xbf16, #tpu.memory_space<any>>
    %34 = tpu.memref_squeeze %33 : memref<1x16x128xbf16, #tpu.memory_space<any>> -> memref<16x128xbf16, #tpu.memory_space<any>>
    %c0_i32_22 = arith.constant 0 : i32
    %c256_i32_23 = arith.constant 256 : i32
    %35 = tpu.memref_slice %arg9[%c0_i32_22, %c256_i32_23] : memref<16x384xbf16, #tpu.memory_space<vmem>> -> memref<16x128xbf16, #tpu.memory_space<vmem>>
    %36 = tpu.memref_slice %arg11[%c2_i32_20] : memref<3x!tpu.dma_semaphore, #tpu.memory_space<semaphore_mem>> -> memref<1x!tpu.dma_semaphore, #tpu.memory_space<semaphore_mem>>
    %37 = tpu.memref_squeeze %36 : memref<1x!tpu.dma_semaphore, #tpu.memory_space<semaphore_mem>> -> memref<!tpu.dma_semaphore, #tpu.memory_space<semaphore_mem>>
    tpu.wait_dma2 semaphore(%37 : memref<!tpu.dma_semaphore, #tpu.memory_space<semaphore_mem>>) src(%34 : memref<16x128xbf16, #tpu.memory_space<any>>) dst(%35 : memref<16x128xbf16, #tpu.memory_space<vmem>>)
    %c0_i32_24 = arith.constant 0 : i32
    %38 = arith.cmpi eq, %arg1, %c0_i32_24 : i32
    %39 = arith.extui %38 : i1 to i32
    %c0_i32_25 = arith.constant 0 : i32
    %40 = arith.cmpi ne, %39, %c0_i32_25 : i32
    scf.if %40 {
      %cst_66 = arith.constant 0.000000e+00 : bf16
      %93 = vector.broadcast %cst_66 : bf16 to vector<16x128xbf16>
      %c0_67 = arith.constant 0 : index
      %c0_68 = arith.constant 0 : index
      %94 = vector.load %arg9[%c0_67, %c0_68] : memref<16x384xbf16, #tpu.memory_space<vmem>>, vector<16x128xbf16>
      tpu.vector_store %arg9[%c0_67, %c0_68], %93 {strides = array<i32>} : memref<16x384xbf16, #tpu.memory_space<vmem>>, vector<16x128xbf16>,
    } else {
    }
    %c1_i32_26 = arith.constant 1 : i32
    %41 = arith.cmpi eq, %arg1, %c1_i32_26 : i32
    %42 = arith.extui %41 : i1 to i32
    %c0_i32_27 = arith.constant 0 : i32
    %43 = arith.cmpi ne, %42, %c0_i32_27 : i32
    scf.if %43 {
      %cst_66 = arith.constant 0.000000e+00 : bf16
      %93 = vector.broadcast %cst_66 : bf16 to vector<16x128xbf16>
      %c0_67 = arith.constant 0 : index
      %c256 = arith.constant 256 : index
      %94 = vector.load %arg9[%c0_67, %c256] : memref<16x384xbf16, #tpu.memory_space<vmem>>, vector<16x128xbf16>
      tpu.vector_store %arg9[%c0_67, %c256], %93 {strides = array<i32>} : memref<16x384xbf16, #tpu.memory_space<vmem>>, vector<16x128xbf16>,
    } else {
    }
    %c0 = arith.constant 0 : index
    %c0_28 = arith.constant 0 : index
    %44 = vector.load %arg2[%c0, %c0_28] : memref<2x128xbf16, #tpu.memory_space<vmem>>, vector<1x128xbf16>
    %c1 = arith.constant 1 : index
    %c0_29 = arith.constant 0 : index
    %45 = vector.load %arg2[%c1, %c0_29] : memref<2x128xbf16, #tpu.memory_space<vmem>>, vector<1x128xbf16>
    %c0_30 = arith.constant 0 : index
    %c111 = arith.constant 111 : index
    %46 = vector.load %arg9[%c0_30, %c111] : memref<16x384xbf16, #tpu.memory_space<vmem>>, vector<16x128xbf16>
    %47 = vector.broadcast %44 : vector<1x128xbf16> to vector<16x128xbf16>
    %48 = arith.mulf %46, %47 : vector<16x128xbf16>
    %c0_31 = arith.constant 0 : index
    %c0_32 = arith.constant 0 : index
    %49 = vector.load %arg10[%c0_31, %c0_32] : memref<144x128xbf16, #tpu.memory_space<vmem>>, vector<16x128xbf16>
    tpu.vector_store %arg10[%c0_31, %c0_32], %48 {strides = array<i32>} : memref<144x128xbf16, #tpu.memory_space<vmem>>, vector<16x128xbf16>,
    %c0_33 = arith.constant 0 : index
    %c112 = arith.constant 112 : index
    %50 = vector.load %arg9[%c0_33, %c112] : memref<16x384xbf16, #tpu.memory_space<vmem>>, vector<16x128xbf16>
    %c16 = arith.constant 16 : index
    %c0_34 = arith.constant 0 : index
    %51 = vector.load %arg10[%c16, %c0_34] : memref<144x128xbf16, #tpu.memory_space<vmem>>, vector<16x128xbf16>
    tpu.vector_store %arg10[%c16, %c0_34], %50 {strides = array<i32>} : memref<144x128xbf16, #tpu.memory_space<vmem>>, vector<16x128xbf16>,
    %c0_35 = arith.constant 0 : index
    %c113 = arith.constant 113 : index
    %52 = vector.load %arg9[%c0_35, %c113] : memref<16x384xbf16, #tpu.memory_space<vmem>>, vector<16x128xbf16>
    %53 = vector.broadcast %45 : vector<1x128xbf16> to vector<16x128xbf16>
    %54 = arith.mulf %52, %53 : vector<16x128xbf16>
    %c32 = arith.constant 32 : index
    %c0_36 = arith.constant 0 : index
    %55 = vector.load %arg10[%c32, %c0_36] : memref<144x128xbf16, #tpu.memory_space<vmem>>, vector<16x128xbf16>
    tpu.vector_store %arg10[%c32, %c0_36], %54 {strides = array<i32>} : memref<144x128xbf16, #tpu.memory_space<vmem>>, vector<16x128xbf16>,
    %c0_37 = arith.constant 0 : index
    %c127 = arith.constant 127 : index
    %56 = vector.load %arg9[%c0_37, %c127] : memref<16x384xbf16, #tpu.memory_space<vmem>>, vector<16x128xbf16>
    %57 = vector.broadcast %44 : vector<1x128xbf16> to vector<16x128xbf16>
    %58 = arith.mulf %56, %57 : vector<16x128xbf16>
    %c48 = arith.constant 48 : index
    %c0_38 = arith.constant 0 : index
    %59 = vector.load %arg10[%c48, %c0_38] : memref<144x128xbf16, #tpu.memory_space<vmem>>, vector<16x128xbf16>
    tpu.vector_store %arg10[%c48, %c0_38], %58 {strides = array<i32>} : memref<144x128xbf16, #tpu.memory_space<vmem>>, vector<16x128xbf16>,
    %c0_39 = arith.constant 0 : index
    %c128 = arith.constant 128 : index
    %60 = vector.load %arg9[%c0_39, %c128] : memref<16x384xbf16, #tpu.memory_space<vmem>>, vector<16x128xbf16>
    %c64 = arith.constant 64 : index
    %c0_40 = arith.constant 0 : index
    %61 = vector.load %arg10[%c64, %c0_40] : memref<144x128xbf16, #tpu.memory_space<vmem>>, vector<16x128xbf16>
    tpu.vector_store %arg10[%c64, %c0_40], %60 {strides = array<i32>} : memref<144x128xbf16, #tpu.memory_space<vmem>>, vector<16x128xbf16>,
    %c0_41 = arith.constant 0 : index
    %c129 = arith.constant 129 : index
    %62 = vector.load %arg9[%c0_41, %c129] : memref<16x384xbf16, #tpu.memory_space<vmem>>, vector<16x128xbf16>
    %63 = vector.broadcast %45 : vector<1x128xbf16> to vector<16x128xbf16>
    %64 = arith.mulf %62, %63 : vector<16x128xbf16>
    %c80 = arith.constant 80 : index
    %c0_42 = arith.constant 0 : index
    %65 = vector.load %arg10[%c80, %c0_42] : memref<144x128xbf16, #tpu.memory_space<vmem>>, vector<16x128xbf16>
    tpu.vector_store %arg10[%c80, %c0_42], %64 {strides = array<i32>} : memref<144x128xbf16, #tpu.memory_space<vmem>>, vector<16x128xbf16>,
    %c0_43 = arith.constant 0 : index
    %c143 = arith.constant 143 : index
    %66 = vector.load %arg9[%c0_43, %c143] : memref<16x384xbf16, #tpu.memory_space<vmem>>, vector<16x128xbf16>
    %67 = vector.broadcast %44 : vector<1x128xbf16> to vector<16x128xbf16>
    %68 = arith.mulf %66, %67 : vector<16x128xbf16>
    %c96 = arith.constant 96 : index
    %c0_44 = arith.constant 0 : index
    %69 = vector.load %arg10[%c96, %c0_44] : memref<144x128xbf16, #tpu.memory_space<vmem>>, vector<16x128xbf16>
    tpu.vector_store %arg10[%c96, %c0_44], %68 {strides = array<i32>} : memref<144x128xbf16, #tpu.memory_space<vmem>>, vector<16x128xbf16>,
    %c0_45 = arith.constant 0 : index
    %c144 = arith.constant 144 : index
    %70 = vector.load %arg9[%c0_45, %c144] : memref<16x384xbf16, #tpu.memory_space<vmem>>, vector<16x128xbf16>
    %c112_46 = arith.constant 112 : index
    %c0_47 = arith.constant 0 : index
    %71 = vector.load %arg10[%c112_46, %c0_47] : memref<144x128xbf16, #tpu.memory_space<vmem>>, vector<16x128xbf16>
    tpu.vector_store %arg10[%c112_46, %c0_47], %70 {strides = array<i32>} : memref<144x128xbf16, #tpu.memory_space<vmem>>, vector<16x128xbf16>,
    %c0_48 = arith.constant 0 : index
    %c145 = arith.constant 145 : index
    %72 = vector.load %arg9[%c0_48, %c145] : memref<16x384xbf16, #tpu.memory_space<vmem>>, vector<16x128xbf16>
    %73 = vector.broadcast %45 : vector<1x128xbf16> to vector<16x128xbf16>
    %74 = arith.mulf %72, %73 : vector<16x128xbf16>
    %c128_49 = arith.constant 128 : index
    %c0_50 = arith.constant 0 : index
    %75 = vector.load %arg10[%c128_49, %c0_50] : memref<144x128xbf16, #tpu.memory_space<vmem>>, vector<16x128xbf16>
    tpu.vector_store %arg10[%c128_49, %c0_50], %74 {strides = array<i32>} : memref<144x128xbf16, #tpu.memory_space<vmem>>, vector<16x128xbf16>,
    %c0_51 = arith.constant 0 : index
    %c0_52 = arith.constant 0 : index
    %76 = vector.load %arg3[%c0_51, %c0_52] : memref<16x144xbf16, #tpu.memory_space<vmem>>, vector<16x144xbf16>
    %c0_53 = arith.constant 0 : index
    %c0_54 = arith.constant 0 : index
    %77 = vector.load %arg10[%c0_53, %c0_54] : memref<144x128xbf16, #tpu.memory_space<vmem>>, vector<144x128xbf16>
    %cst = arith.constant dense<0.000000e+00> : vector<16x128xf32>
    %78 = tpu.matmul %76, %77, %cst {dimension_numbers = #tpu.dot_dimension_numbers<[1], [0], [0], [1], [0, 0, 1, 1], [], []>} : vector<16x144xbf16>, vector<144x128xbf16>, vector<16x128xf32> -> vector<16x128xf32>
    %c0_55 = arith.constant 0 : index
    %c0_56 = arith.constant 0 : index
    %79 = vector.load %arg4[%c0_55, %c0_56] : memref<16x1xf32, #tpu.memory_space<vmem>>, vector<16x1xf32>
    %80 = vector.broadcast %79 : vector<16x1xf32> to vector<16x128xf32>
    %81 = arith.addf %78, %80 : vector<16x128xf32>
    %cst_57 = arith.constant 0.000000e+00 : f32
    %82 = vector.broadcast %cst_57 : f32 to vector<16x128xf32>
    %83 = arith.maximumf %81, %82 : vector<16x128xf32>
    %c0_58 = arith.constant 0 : index
    %c0_59 = arith.constant 0 : index
    %84 = vector.load %arg5[%c0_58, %c0_59] : memref<3x16xbf16, #tpu.memory_space<vmem>>, vector<3x16xbf16>
    %85 = arith.truncf %83 : vector<16x128xf32> to vector<16x128xbf16>
    %cst_60 = arith.constant dense<0.000000e+00> : vector<3x128xf32>
    %86 = tpu.matmul %84, %85, %cst_60 {dimension_numbers = #tpu.dot_dimension_numbers<[1], [0], [0], [1], [0, 0, 1, 1], [], []>} : vector<3x16xbf16>, vector<16x128xbf16>, vector<3x128xf32> -> vector<3x128xf32>
    %c0_61 = arith.constant 0 : index
    %c0_62 = arith.constant 0 : index
    %87 = vector.load %arg6[%c0_61, %c0_62] : memref<3x1xf32, #tpu.memory_space<vmem>>, vector<3x1xf32>
    %88 = vector.broadcast %87 : vector<3x1xf32> to vector<3x128xf32>
    %89 = arith.addf %86, %88 : vector<3x128xf32>
    %c0_63 = arith.constant 0 : index
    %c0_64 = arith.constant 0 : index
    %c0_65 = arith.constant 0 : index
    %90 = vector.load %arg8[%c0_63, %c0_64, %c0_65] : memref<1x3x128xf32, #tpu.memory_space<vmem>>, vector<1x3x128xf32>
    %91 = vector.shape_cast %90 : vector<1x3x128xf32> to vector<3x128xf32>
    %92 = vector.shape_cast %89 : vector<3x128xf32> to vector<1x3x128xf32>
    tpu.vector_store %arg8[%c0_63, %c0_64, %c0_65], %92 {strides = array<i32>} : memref<1x3x128xf32, #tpu.memory_space<vmem>>, vector<1x3x128xf32>,
    return
  }
  func.func @transform_0(%arg0: i32, %arg1: i32) -> (i32, i32) {
    %c0_i32 = arith.constant 0 : i32
    %c0_i32_0 = arith.constant 0 : i32
    %c0_i32_1 = arith.constant 0 : i32
    return %c0_i32, %c0_i32_0 : i32, i32
  }
  func.func @transform_1(%arg0: i32, %arg1: i32) -> (i32, i32) {
    %c0_i32 = arith.constant 0 : i32
    %c0_i32_0 = arith.constant 0 : i32
    %c0_i32_1 = arith.constant 0 : i32
    return %c0_i32, %c0_i32_0 : i32, i32
  }
  func.func @transform_2(%arg0: i32, %arg1: i32) -> (i32, i32) {
    %c0_i32 = arith.constant 0 : i32
    %c0_i32_0 = arith.constant 0 : i32
    %c0_i32_1 = arith.constant 0 : i32
    return %c0_i32, %c0_i32_0 : i32, i32
  }
  func.func @transform_3(%arg0: i32, %arg1: i32) -> (i32, i32) {
    %c0_i32 = arith.constant 0 : i32
    %c0_i32_0 = arith.constant 0 : i32
    %c0_i32_1 = arith.constant 0 : i32
    return %c0_i32, %c0_i32_0 : i32, i32
  }
  func.func @transform_4(%arg0: i32, %arg1: i32) -> (i32, i32) {
    %c0_i32 = arith.constant 0 : i32
    %c0_i32_0 = arith.constant 0 : i32
    %c0_i32_1 = arith.constant 0 : i32
    return %c0_i32, %c0_i32_0 : i32, i32
  }
  func.func @transform_6(%arg0: i32, %arg1: i32) -> (i32, i32, i32) {
    %c0_i32 = arith.constant 0 : i32
    %c0_i32_0 = arith.constant 0 : i32
    return %arg0, %c0_i32, %arg1 : i32, i32, i32
  }
}

</mosaic_0001>

<llo_original>
// kernel: bev_segm_head_forward.1
$region0: #{bev_segm_head_forward.1}
  #allocation0 [shape = 'u32[]', space=smem, size = 0x4, offset = 0x4, fixed_abs, tag = 'smem constant byte address 0x4 - core index']
  #allocation1 [shape = 'u32[144,128]{1,0:T(1,128)}', space=vmem, size = 0x12000, scoped, tag = 'internal scratch']
  #allocation2 [shape = 'bf16[16,384]{1,0:T(16,128)(2,1)}', space=vmem, size = 0x3000, scoped, tag = 'scratch operand']
  #allocation3 [shape = 'bf16[144,128]{1,0:T(16,128)(2,1)}', space=vmem, size = 0x9000, scoped, tag = 'scratch operand']
  #allocation4 [shape = 's32[3]{0}', space=sflag, size = 0xc, scoped, tag = 'scratch operand']
  #allocation5 [shape = 's32[]', space=sflag, size = 0x4, offset = 0, fixed_abs, tag = 'sflag constant byte address 0x0 - dummy sync flag']
  #allocation6 [shape = 's32[]', space=sflag, size = 0x4, offset = 0, fixed_abs, tag = 'sflag constant byte address 0x0 - dummy sync flag']
  #allocation7 [shape = 's32[]', space=sflag, size = 0x4, offset = 0, fixed_abs, tag = 'sflag constant byte address 0x0 - dummy sync flag']
  %s0 = inlined_call_operand.vmem [shape: bf16[2,128], index: 0, kind: input, shape index: {}]
  %s1 = inlined_call_operand.vmem [shape: bf16[16,144], index: 1, kind: input, shape index: {}]
  %s2 = inlined_call_operand.vmem [shape: f32[16,1], index: 2, kind: input, shape index: {}]
  %s3 = inlined_call_operand.vmem [shape: bf16[3,16], index: 3, kind: input, shape index: {}]
  %s4 = inlined_call_operand.vmem [shape: f32[3,1], index: 4, kind: input, shape index: {}]
  %s5 = inlined_call_operand.vmem [shape: bf16[2,16,256], index: 5, kind: input, shape index: {}]
  %s6 = inlined_call_operand.vmem [shape: f32[2,3,256], index: 6, kind: output, shape index: {}]
  %s7 = sld [smem:[#allocation0]]
  $region172: #{bev_segm_head_forward.1} parent=0
    _
  %s9 = ssub.s32 1, %s7
  %s10 = scalar_select 0, %s9, %s7
  loop: start=0, step=1, limit=6
  $region2: #{bev_segm_head_forward.1} parent=0 // loop_pre_header
    _
  $region3: #{bev_segm_head_forward.1} parent=0 // loop_header
    %s12 = sphi 0, %s16
    %p13 = scmp.ge.s32.totalorder %s12, 6
    %s19 = sphi 0, %s31
    %s20 = sphi 0, %s27
    %s21 = sphi 0, %s19
    %s22 = sphi 0, %s20
    %s23 = sphi 0, %s21
    %s24 = sphi 0, %s22
    %s32 = sphi 0, %s32
    %s34 = sphi 0, %s32
    %s35 = sphi 0, %s34
    %s49 = sphi 0, %s35
    %s53 = sphi 0, %s53
    %s55 = sphi 0, %s53
    %s56 = sphi 0, %s55
    %s70 = sphi 0, %s56
    %s74 = sphi 0, %s74
    %s76 = sphi 0, %s74
    %s77 = sphi 0, %s76
    %s91 = sphi 0, %s77
    %s95 = sphi 0, %s95
    %s97 = sphi 0, %s95
    %s98 = sphi 0, %s97
    %s112 = sphi 0, %s98
    %s116 = sphi 0, %s116
    %s118 = sphi 0, %s116
    %s119 = sphi 0, %s118
    %s133 = sphi 0, %s119
    %s141 = sphi 0, %s143
    %s144 = sphi 0, %s141
    %s145 = sphi 0, %s144
    %s161 = sphi 0, %s145
  $region4: #{bev_segm_head_forward.1} parent=0 // loop_header_branch
    %15 = sbr.rel (%p13) target = $region8
  $region5: #{bev_segm_head_forward.1} parent=0 // loop_body
    %s17 = ssub.s32 %s12, 1
    %s18 = ssub.s32 %s12, 2
    %s25 = sadd.s32 1, %s20
    %p26 = scmp.ge.s32.totalorder %s25, 2
    %s27 = scalar_select %p26, 0, %s25
    %s28 = sadd.s32 1, %s19
    %s29 = scalar_select %p26, %s28, %s19
    %p30 = scmp.ge.s32.totalorder %s29, 2
    %s31 = scalar_select %p30, 0, %s29
    %s33 = sadd.s32 %s32, 1
    %p36 = scmp.eq.s32.totalorder %s12, 3
    %p37 = scmp.ne.s32.totalorder %s32, %s34
    %p38 = scmp.eq.s32.totalorder %s12, 0
    %p39 = por %p37, %p38
    %p40 = scmp.ne.s32.totalorder %s32, %s34
    %p41 = scmp.eq.s32.totalorder %s17, 3
    %p42 = por %p40, %p41
    %p43 = scmp.ne.s32.totalorder %s34, %s35
    %p44 = scmp.eq.s32.totalorder %s17, 0
    %p45 = por %p43, %p44
    %p46 = scmp.ne.s32.totalorder %s34, %s35
    %p47 = scmp.eq.s32.totalorder %s18, 3
    %p48 = por %p46, %p47
    %p50 = scmp.ne.s32.totalorder %s35, %s49
    %p51 = scmp.eq.s32.totalorder %s18, 0
    %p52 = por %p50, %p51
    %s54 = sadd.s32 %s53, 1
    %p57 = scmp.eq.s32.totalorder %s12, 3
    %p58 = scmp.ne.s32.totalorder %s53, %s55
    %p59 = scmp.eq.s32.totalorder %s12, 0
    %p60 = por %p58, %p59
    %p61 = scmp.ne.s32.totalorder %s53, %s55
    %p62 = scmp.eq.s32.totalorder %s17, 3
    %p63 = por %p61, %p62
    %p64 = scmp.ne.s32.totalorder %s55, %s56
    %p65 = scmp.eq.s32.totalorder %s17, 0
    %p66 = por %p64, %p65
    %p67 = scmp.ne.s32.totalorder %s55, %s56
    %p68 = scmp.eq.s32.totalorder %s18, 3
    %p69 = por %p67, %p68
    %p71 = scmp.ne.s32.totalorder %s56, %s70
    %p72 = scmp.eq.s32.totalorder %s18, 0
    %p73 = por %p71, %p72
    %s75 = sadd.s32 %s74, 1
    %p78 = scmp.eq.s32.totalorder %s12, 3
    %p79 = scmp.ne.s32.totalorder %s74, %s76
    %p80 = scmp.eq.s32.totalorder %s12, 0
    %p81 = por %p79, %p80
    %p82 = scmp.ne.s32.totalorder %s74, %s76
    %p83 = scmp.eq.s32.totalorder %s17, 3
    %p84 = por %p82, %p83
    %p85 = scmp.ne.s32.totalorder %s76, %s77
    %p86 = scmp.eq.s32.totalorder %s17, 0
    %p87 = por %p85, %p86
    %p88 = scmp.ne.s32.totalorder %s76, %s77
    %p89 = scmp.eq.s32.totalorder %s18, 3
    %p90 = por %p88, %p89
    %p92 = scmp.ne.s32.totalorder %s77, %s91
    %p93 = scmp.eq.s32.totalorder %s18, 0
    %p94 = por %p92, %p93
    %s96 = sadd.s32 %s95, 1
    %p99 = scmp.eq.s32.totalorder %s12, 3
    %p100 = scmp.ne.s32.totalorder %s95, %s97
    %p101 = scmp.eq.s32.totalorder %s12, 0
    %p102 = por %p100, %p101
    %p103 = scmp.ne.s32.totalorder %s95, %s97
    %p104 = scmp.eq.s32.totalorder %s17, 3
    %p105 = por %p103, %p104
    %p106 = scmp.ne.s32.totalorder %s97, %s98
    %p107 = scmp.eq.s32.totalorder %s17, 0
    %p108 = por %p106, %p107
    %p109 = scmp.ne.s32.totalorder %s97, %s98
    %p110 = scmp.eq.s32.totalorder %s18, 3
    %p111 = por %p109, %p110
    %p113 = scmp.ne.s32.totalorder %s98, %s112
    %p114 = scmp.eq.s32.totalorder %s18, 0
    %p115 = por %p113, %p114
    %s117 = sadd.s32 %s116, 1
    %p120 = scmp.eq.s32.totalorder %s12, 3
    %p121 = scmp.ne.s32.totalorder %s116, %s118
    %p122 = scmp.eq.s32.totalorder %s12, 0
    %p123 = por %p121, %p122
    %p124 = scmp.ne.s32.totalorder %s116, %s118
    %p125 = scmp.eq.s32.totalorder %s17, 3
    %p126 = por %p124, %p125
    %p127 = scmp.ne.s32.totalorder %s118, %s119
    %p128 = scmp.eq.s32.totalorder %s17, 0
    %p129 = por %p127, %p128
    %p130 = scmp.ne.s32.totalorder %s118, %s119
    %p131 = scmp.eq.s32.totalorder %s18, 3
    %p132 = por %p130, %p131
    %p134 = scmp.ne.s32.totalorder %s119, %s133
    %p135 = scmp.eq.s32.totalorder %s18, 0
    %p136 = por %p134, %p135
    %s137 = ssub.s32 %s19, %s31
    %s138 = ssub.s32 %s20, %s27
    %s139 = sor.u32 %s137, %s138
    %p140 = scmp.eq.s32.totalorder %s139, 0
    %s142 = sadd.s32 %s141, 1
    %s143 = scalar_select %p140, %s141, %s142
    %p146 = pneg %p140
    %p147 = scmp.eq.s32.totalorder %s12, 3
    %p148 = por %p146, %p147
    %p149 = scmp.ne.s32.totalorder %s141, %s144
    %p150 = scmp.eq.s32.totalorder %s12, 0
    %p151 = por %p149, %p150
    %p152 = scmp.ne.s32.totalorder %s141, %s144
    %p153 = scmp.eq.s32.totalorder %s17, 3
    %p154 = por %p152, %p153
    %p155 = scmp.ne.s32.totalorder %s144, %s145
    %p156 = scmp.eq.s32.totalorder %s17, 0
    %p157 = por %p155, %p156
    %p158 = scmp.ne.s32.totalorder %s144, %s145
    %p159 = scmp.eq.s32.totalorder %s18, 3
    %p160 = por %p158, %p159
    %p162 = scmp.ne.s32.totalorder %s145, %s161
    %p163 = scmp.eq.s32.totalorder %s18, 0
    %p164 = por %p162, %p163
    %p165 = scmp.le.s32.totalorder 1, %s12
    %p166 = scmp.lt.s32.totalorder %s12, 5
    %p167 = pnand %p165, %p166
    %p168 = pneg %p167
    // Predicated region
    $region9: #{bev_segm_head_forward.1} parent=5 // pred_check
      _
    $region10: #{bev_segm_head_forward.1} parent=5 // pred_check_branch
      %170 = sbr.rel (%p167) target = $region12
    $region11: #{bev_segm_head_forward.1} parent=5 // pred_region
      %s171 = ssub.s32 %s12, 1
      // Predicated region
      $region13: #{bev_segm_head_forward.1} parent=11 // pred_check
        %p172 = pneg %p45
      $region14: #{bev_segm_head_forward.1} parent=11 // pred_check_branch
        %174 = sbr.rel (%p172) target = $region16
      $region15: #{bev_segm_head_forward.1} parent=11 // pred_region
        _
      $region16: #{bev_segm_head_forward.1} parent=11 // pred_fallthru
        _
      // Predicated region
      $region17: #{bev_segm_head_forward.1} parent=11 // pred_check
        %p175 = pneg %p66
      $region18: #{bev_segm_head_forward.1} parent=11 // pred_check_branch
        %177 = sbr.rel (%p175) target = $region20
      $region19: #{bev_segm_head_forward.1} parent=11 // pred_region
        _
      $region20: #{bev_segm_head_forward.1} parent=11 // pred_fallthru
        _
      // Predicated region
      $region21: #{bev_segm_head_forward.1} parent=11 // pred_check
        %p178 = pneg %p87
      $region22: #{bev_segm_head_forward.1} parent=11 // pred_check_branch
        %180 = sbr.rel (%p178) target = $region24
      $region23: #{bev_segm_head_forward.1} parent=11 // pred_region
        _
      $region24: #{bev_segm_head_forward.1} parent=11 // pred_fallthru
        _
      // Predicated region
      $region25: #{bev_segm_head_forward.1} parent=11 // pred_check
        %p181 = pneg %p108
      $region26: #{bev_segm_head_forward.1} parent=11 // pred_check_branch
        %183 = sbr.rel (%p181) target = $region28
      $region27: #{bev_segm_head_forward.1} parent=11 // pred_region
        _
      $region28: #{bev_segm_head_forward.1} parent=11 // pred_fallthru
        _
      // Predicated region
      $region29: #{bev_segm_head_forward.1} parent=11 // pred_check
        %p184 = pneg %p129
      $region30: #{bev_segm_head_forward.1} parent=11 // pred_check_branch
        %186 = sbr.rel (%p184) target = $region32
      $region31: #{bev_segm_head_forward.1} parent=11 // pred_region
        _
      $region32: #{bev_segm_head_forward.1} parent=11 // pred_fallthru
        _
    $region12: #{bev_segm_head_forward.1} parent=5 // pred_fallthru
      _
    %p187 = scmp.lt.s32.totalorder %s12, 4
    // Predicated region
    $region33: #{bev_segm_head_forward.1} parent=5 // pred_check
      %p188 = pneg %p187
    $region34: #{bev_segm_head_forward.1} parent=5 // pred_check_branch
      %190 = sbr.rel (%p188) target = $region36
    $region35: #{bev_segm_head_forward.1} parent=5 // pred_region
      _
    $region36: #{bev_segm_head_forward.1} parent=5 // pred_fallthru
      _
    %p191 = scmp.le.s32.totalorder 1, %s12
    %p192 = scmp.lt.s32.totalorder %s12, 5
    %p193 = pnand %p191, %p192
    %p194 = pneg %p193
    // Predicated region
    $region37: #{bev_segm_head_forward.1} parent=5 // pred_check
      _
    $region38: #{bev_segm_head_forward.1} parent=5 // pred_check_branch
      %196 = sbr.rel (%p193) target = $region40
    $region39: #{bev_segm_head_forward.1} parent=5 // pred_region
      %s197 = ssub.s32 %s12, 1
      %p198 = pneg %p45
      %p199 = pneg %p42
      %p200 = pneg %p66
      %p201 = pneg %p63
      %p202 = pneg %p87
      %p203 = pneg %p84
      %p204 = pneg %p108
      %p205 = pneg %p105
      %p206 = pneg %p129
      %p207 = pneg %p126
      %p208 = pneg %p157
      %p209 = pneg %p154
      %p210 = scmp.lt.s32.totalorder %s21, 1
      %s211 = scalar_select %p210, %s21, 1
      %p212 = scmp.lt.s32.totalorder %s22, 1
      %s213 = scalar_select %p212, %s22, 1
      %s214 = smul.addr %s211, 2
      %s215 = sadd.s32 %s213, %s214
      %s216 = smul.addr %s215, 4
      %s217 = scalar_lea.vmem %s6, %s216
      %p218 = scmp.lt.s32.totalorder %s21, 1
      %s219 = scalar_select %p218, %s21, 1
      %p220 = scmp.lt.s32.totalorder %s22, 1
      %s221 = scalar_select %p220, %s22, 1
      %s222 = smul.addr %s219, 2
      %s223 = sadd.s32 %s221, %s222
      %s224 = smul.addr %s223, 4
      %s225 = scalar_lea.vmem %s6, %s224
      %s227 = smul.u32 %s22, 128
      %s228 = ssub.s32 %s227, 128
      %p229 = scmp.gt.s32.totalorder %s228, 0
      %s230 = scalar_select %p229, %s228, 0
      %s231 = sadd.s32 %s227, 128
      %p232 = scmp.lt.s32.totalorder %s231, 128
      %s233 = scalar_select %p232, %s231, 128
      %s234 = sshra.s32 %s230, 7
      %s235 = sand.u32 %s230, 127
      %s236 = smul.u32 %s21, 4
      %s237 = sadd.s32 %s234, %s236
      %s238 = smul.addr %s237, 4
      %s239 = scalar_lea.vmem %s5, %s238
      %p241 = scmp.lt.u32.totalorder 4, 8
      %p242 = pneg %p241
      // Predicated region
      $region41: #{bev_segm_head_forward.1} parent=39 // pred_check
        _
      $region42: #{bev_segm_head_forward.1} parent=39 // pred_check_branch
        %244 = sbr.rel (%p241) target = $region44
      $region43: #{bev_segm_head_forward.1} parent=39 // pred_region
        %s261 = sand.u32 4, 7
        %p262 = scmp.eq.s32.totalorder %s261, 0
        %p263 = pneg %p262
        // Predicated region
        $region56: #{bev_segm_head_forward.1} parent=43 // pred_check
          _
        $region57: #{bev_segm_head_forward.1} parent=43 // pred_check_branch
          %265 = sbr.rel (%p262) target = $region59
        $region58: #{bev_segm_head_forward.1} parent=43 // pred_region
          %s266 = sand.u32 4, 7
          %s267 = ssub.s32 4, %s266
          %s268 = scalar_lea.vmem %s239, %s267
          %s269 = ssub.s32 4, %s266
          %s270 = scalar_lea.vmem [#allocation2], %s269
          loop: start=0, step=1, limit=1
          $region60: #{bev_segm_head_forward.1} parent=58 // loop_pre_header
            _
          $region61: #{bev_segm_head_forward.1} parent=58 // loop_header
            %s272 = sphi 0, %s276
            %p273 = scmp.ge.s32.totalorder %s272, 1
            %s277 = sphi %s239, %s239
            %s278 = sphi [#allocation2], [#allocation2]
          $region62: #{bev_segm_head_forward.1} parent=58 // loop_header_branch
            %275 = sbr.rel (%p273) target = $region66
          $region63: #{bev_segm_head_forward.1} parent=58 // loop_body
            _
          $region64: #{bev_segm_head_forward.1} parent=58 // loop_footer
            %s276 = sadd.s32 1, %s272
          $region65: #{bev_segm_head_forward.1} parent=58 // loop_footer_branch
            %271 = sbr.rel target = $region61
          $region66: #{bev_segm_head_forward.1} parent=58 // loop_exit
            _
          %s279 = sshllo.u32 0, %s266
          loop: start=0, step=1, limit=1
          $region67: #{bev_segm_head_forward.1} parent=58 // loop_pre_header
            _
          $region68: #{bev_segm_head_forward.1} parent=58 // loop_header
            %s281 = sphi 0, %s285
            %p282 = scmp.ge.s32.totalorder %s281, 1
            %s286 = sphi %s268, %s268
            %s287 = sphi %s270, %s270
          $region69: #{bev_segm_head_forward.1} parent=58 // loop_header_branch
            %284 = sbr.rel (%p282) target = $region73
          $region70: #{bev_segm_head_forward.1} parent=58 // loop_body
            %v288 = vld [vmem:[%s286] sm:%s279]
            %289 = vst [vmem:[%s287] sm:%s279] %v288
            %v290 = vld [vmem:[%s286 + $0x8] sm:%s279]
            %291 = vst [vmem:[%s287 + $0x4] sm:%s279] %v290
          $region71: #{bev_segm_head_forward.1} parent=58 // loop_footer
            %s285 = sadd.s32 1, %s281
          $region72: #{bev_segm_head_forward.1} parent=58 // loop_footer_branch
            %280 = sbr.rel target = $region68
          $region73: #{bev_segm_head_forward.1} parent=58 // loop_exit
            _
        $region59: #{bev_segm_head_forward.1} parent=43 // pred_fallthru
          _
      $region44: #{bev_segm_head_forward.1} parent=39 // pred_fallthru
        _
      // Predicated region
      $region45: #{bev_segm_head_forward.1} parent=39 // pred_check
        %p245 = pneg %p241
      $region46: #{bev_segm_head_forward.1} parent=39 // pred_check_branch
        %247 = sbr.rel (%p245) target = $region48
      $region47: #{bev_segm_head_forward.1} parent=39 // pred_region
        %s248 = sshllo.u32 0, 4
        loop: start=0, step=1, limit=1
        $region49: #{bev_segm_head_forward.1} parent=47 // loop_pre_header
          _
        $region50: #{bev_segm_head_forward.1} parent=47 // loop_header
          %s250 = sphi 0, %s254
          %p251 = scmp.ge.s32.totalorder %s250, 1
          %s255 = sphi %s239, %s239
          %s256 = sphi [#allocation2], [#allocation2]
        $region51: #{bev_segm_head_forward.1} parent=47 // loop_header_branch
          %253 = sbr.rel (%p251) target = $region55
        $region52: #{bev_segm_head_forward.1} parent=47 // loop_body
          %v257 = vld [vmem:[%s255] sm:%s248]
          %258 = vst [vmem:[%s256] sm:%s248] %v257
          %v259 = vld [vmem:[%s255 + $0x8] sm:%s248]
          %260 = vst [vmem:[%s256 + $0x4] sm:%s248] %v259
        $region53: #{bev_segm_head_forward.1} parent=47 // loop_footer
          %s254 = sadd.s32 1, %s250
        $region54: #{bev_segm_head_forward.1} parent=47 // loop_footer_branch
          %249 = sbr.rel target = $region50
        $region55: #{bev_segm_head_forward.1} parent=47 // loop_exit
          _
      $region48: #{bev_segm_head_forward.1} parent=39 // pred_fallthru
        _
      // Predicated region
      $region74: #{bev_segm_head_forward.1} parent=39 // pred_check
        _
      $region75: #{bev_segm_head_forward.1} parent=39 // pred_check_branch
        %294 = sbr.rel (0) target = $region77
      $region76: #{bev_segm_head_forward.1} parent=39 // pred_region
        %295 = vsyncadd [#allocation4], 128
      $region77: #{bev_segm_head_forward.1} parent=39 // pred_fallthru
        _
      %s296 = sshra.s32 %s227, 7
      %s297 = sand.u32 %s227, 127
      %s298 = sadd.s32 %s296, %s236
      %s299 = smul.addr %s298, 4
      %s300 = scalar_lea.vmem %s5, %s299
      %s301 = scalar_lea.vmem [#allocation2], 8
      %s302 = scalar_lea.sflag [#allocation4], 1
      %p304 = scmp.lt.u32.totalorder 4, 8
      %p305 = pneg %p304
      // Predicated region
      $region78: #{bev_segm_head_forward.1} parent=39 // pred_check
        _
      $region79: #{bev_segm_head_forward.1} parent=39 // pred_check_branch
        %307 = sbr.rel (%p304) target = $region81
      $region80: #{bev_segm_head_forward.1} parent=39 // pred_region
        %s324 = sand.u32 4, 7
        %p325 = scmp.eq.s32.totalorder %s324, 0
        %p326 = pneg %p325
        // Predicated region
        $region93: #{bev_segm_head_forward.1} parent=80 // pred_check
          _
        $region94: #{bev_segm_head_forward.1} parent=80 // pred_check_branch
          %328 = sbr.rel (%p325) target = $region96
        $region95: #{bev_segm_head_forward.1} parent=80 // pred_region
          %s329 = sand.u32 4, 7
          %s330 = ssub.s32 4, %s329
          %s331 = scalar_lea.vmem %s300, %s330
          %s332 = ssub.s32 4, %s329
          %s333 = scalar_lea.vmem %s301, %s332 [#allocation2]
          loop: start=0, step=1, limit=1
          $region97: #{bev_segm_head_forward.1} parent=95 // loop_pre_header
            _
          $region98: #{bev_segm_head_forward.1} parent=95 // loop_header
            %s335 = sphi 0, %s339
            %p336 = scmp.ge.s32.totalorder %s335, 1
            %s340 = sphi %s300, %s300
            %s341 = sphi %s301, %s301
          $region99: #{bev_segm_head_forward.1} parent=95 // loop_header_branch
            %338 = sbr.rel (%p336) target = $region103
          $region100: #{bev_segm_head_forward.1} parent=95 // loop_body
            _
          $region101: #{bev_segm_head_forward.1} parent=95 // loop_footer
            %s339 = sadd.s32 1, %s335
          $region102: #{bev_segm_head_forward.1} parent=95 // loop_footer_branch
            %334 = sbr.rel target = $region98
          $region103: #{bev_segm_head_forward.1} parent=95 // loop_exit
            _
          %s342 = sshllo.u32 0, %s329
          loop: start=0, step=1, limit=1
          $region104: #{bev_segm_head_forward.1} parent=95 // loop_pre_header
            _
          $region105: #{bev_segm_head_forward.1} parent=95 // loop_header
            %s344 = sphi 0, %s348
            %p345 = scmp.ge.s32.totalorder %s344, 1
            %s349 = sphi %s331, %s331
            %s350 = sphi %s333, %s333
          $region106: #{bev_segm_head_forward.1} parent=95 // loop_header_branch
            %347 = sbr.rel (%p345) target = $region110
          $region107: #{bev_segm_head_forward.1} parent=95 // loop_body
            %v351 = vld [vmem:[%s349] sm:%s342]
            %352 = vst [vmem:[%s350] sm:%s342] %v351
            %v353 = vld [vmem:[%s349 + $0x8] sm:%s342]
            %354 = vst [vmem:[%s350 + $0x4] sm:%s342] %v353
          $region108: #{bev_segm_head_forward.1} parent=95 // loop_footer
            %s348 = sadd.s32 1, %s344
          $region109: #{bev_segm_head_forward.1} parent=95 // loop_footer_branch
            %343 = sbr.rel target = $region105
          $region110: #{bev_segm_head_forward.1} parent=95 // loop_exit
            _
        $region96: #{bev_segm_head_forward.1} parent=80 // pred_fallthru
          _
      $region81: #{bev_segm_head_forward.1} parent=39 // pred_fallthru
        _
      // Predicated region
      $region82: #{bev_segm_head_forward.1} parent=39 // pred_check
        %p308 = pneg %p304
      $region83: #{bev_segm_head_forward.1} parent=39 // pred_check_branch
        %310 = sbr.rel (%p308) target = $region85
      $region84: #{bev_segm_head_forward.1} parent=39 // pred_region
        %s311 = sshllo.u32 0, 4
        loop: start=0, step=1, limit=1
        $region86: #{bev_segm_head_forward.1} parent=84 // loop_pre_header
          _
        $region87: #{bev_segm_head_forward.1} parent=84 // loop_header
          %s313 = sphi 0, %s317
          %p314 = scmp.ge.s32.totalorder %s313, 1
          %s318 = sphi %s300, %s300
          %s319 = sphi %s301, %s301
        $region88: #{bev_segm_head_forward.1} parent=84 // loop_header_branch
          %316 = sbr.rel (%p314) target = $region92
        $region89: #{bev_segm_head_forward.1} parent=84 // loop_body
          %v320 = vld [vmem:[%s318] sm:%s311]
          %321 = vst [vmem:[%s319] sm:%s311] %v320
          %v322 = vld [vmem:[%s318 + $0x8] sm:%s311]
          %323 = vst [vmem:[%s319 + $0x4] sm:%s311] %v322
        $region90: #{bev_segm_head_forward.1} parent=84 // loop_footer
          %s317 = sadd.s32 1, %s313
        $region91: #{bev_segm_head_forward.1} parent=84 // loop_footer_branch
          %312 = sbr.rel target = $region87
        $region92: #{bev_segm_head_forward.1} parent=84 // loop_exit
          _
      $region85: #{bev_segm_head_forward.1} parent=39 // pred_fallthru
        _
      // Predicated region
      $region111: #{bev_segm_head_forward.1} parent=39 // pred_check
        _
      $region112: #{bev_segm_head_forward.1} parent=39 // pred_check_branch
        %357 = sbr.rel (0) target = $region114
      $region113: #{bev_segm_head_forward.1} parent=39 // pred_region
        %358 = vsyncadd %s302, 128
      $region114: #{bev_segm_head_forward.1} parent=39 // pred_fallthru
        _
      %s359 = sshra.s32 %s233, 7
      %s360 = sand.u32 %s233, 127
      %s361 = sadd.s32 %s359, %s236
      %s362 = smul.addr %s361, 4
      %s363 = scalar_lea.vmem %s5, %s362
      %s364 = scalar_lea.vmem [#allocation2], 16
      %s365 = scalar_lea.sflag [#allocation4], 2
      %p367 = scmp.lt.u32.totalorder 4, 8
      %p368 = pneg %p367
      // Predicated region
      $region115: #{bev_segm_head_forward.1} parent=39 // pred_check
        _
      $region116: #{bev_segm_head_forward.1} parent=39 // pred_check_branch
        %370 = sbr.rel (%p367) target = $region118
      $region117: #{bev_segm_head_forward.1} parent=39 // pred_region
        %s387 = sand.u32 4, 7
        %p388 = scmp.eq.s32.totalorder %s387, 0
        %p389 = pneg %p388
        // Predicated region
        $region130: #{bev_segm_head_forward.1} parent=117 // pred_check
          _
        $region131: #{bev_segm_head_forward.1} parent=117 // pred_check_branch
          %391 = sbr.rel (%p388) target = $region133
        $region132: #{bev_segm_head_forward.1} parent=117 // pred_region
          %s392 = sand.u32 4, 7
          %s393 = ssub.s32 4, %s392
          %s394 = scalar_lea.vmem %s363, %s393
          %s395 = ssub.s32 4, %s392
          %s396 = scalar_lea.vmem %s364, %s395 [#allocation2]
          loop: start=0, step=1, limit=1
          $region134: #{bev_segm_head_forward.1} parent=132 // loop_pre_header
            _
          $region135: #{bev_segm_head_forward.1} parent=132 // loop_header
            %s398 = sphi 0, %s402
            %p399 = scmp.ge.s32.totalorder %s398, 1
            %s403 = sphi %s363, %s363
            %s404 = sphi %s364, %s364
          $region136: #{bev_segm_head_forward.1} parent=132 // loop_header_branch
            %401 = sbr.rel (%p399) target = $region140
          $region137: #{bev_segm_head_forward.1} parent=132 // loop_body
            _
          $region138: #{bev_segm_head_forward.1} parent=132 // loop_footer
            %s402 = sadd.s32 1, %s398
          $region139: #{bev_segm_head_forward.1} parent=132 // loop_footer_branch
            %397 = sbr.rel target = $region135
          $region140: #{bev_segm_head_forward.1} parent=132 // loop_exit
            _
          %s405 = sshllo.u32 0, %s392
          loop: start=0, step=1, limit=1
          $region141: #{bev_segm_head_forward.1} parent=132 // loop_pre_header
            _
          $region142: #{bev_segm_head_forward.1} parent=132 // loop_header
            %s407 = sphi 0, %s411
            %p408 = scmp.ge.s32.totalorder %s407, 1
            %s412 = sphi %s394, %s394
            %s413 = sphi %s396, %s396
          $region143: #{bev_segm_head_forward.1} parent=132 // loop_header_branch
            %410 = sbr.rel (%p408) target = $region147
          $region144: #{bev_segm_head_forward.1} parent=132 // loop_body
            %v414 = vld [vmem:[%s412] sm:%s405]
            %415 = vst [vmem:[%s413] sm:%s405] %v414
            %v416 = vld [vmem:[%s412 + $0x8] sm:%s405]
            %417 = vst [vmem:[%s413 + $0x4] sm:%s405] %v416
          $region145: #{bev_segm_head_forward.1} parent=132 // loop_footer
            %s411 = sadd.s32 1, %s407
          $region146: #{bev_segm_head_forward.1} parent=132 // loop_footer_branch
            %406 = sbr.rel target = $region142
          $region147: #{bev_segm_head_forward.1} parent=132 // loop_exit
            _
        $region133: #{bev_segm_head_forward.1} parent=117 // pred_fallthru
          _
      $region118: #{bev_segm_head_forward.1} parent=39 // pred_fallthru
        _
      // Predicated region
      $region119: #{bev_segm_head_forward.1} parent=39 // pred_check
        %p371 = pneg %p367
      $region120: #{bev_segm_head_forward.1} parent=39 // pred_check_branch
        %373 = sbr.rel (%p371) target = $region122
      $region121: #{bev_segm_head_forward.1} parent=39 // pred_region
        %s374 = sshllo.u32 0, 4
        loop: start=0, step=1, limit=1
        $region123: #{bev_segm_head_forward.1} parent=121 // loop_pre_header
          _
        $region124: #{bev_segm_head_forward.1} parent=121 // loop_header
          %s376 = sphi 0, %s380
          %p377 = scmp.ge.s32.totalorder %s376, 1
          %s381 = sphi %s363, %s363
          %s382 = sphi %s364, %s364
        $region125: #{bev_segm_head_forward.1} parent=121 // loop_header_branch
          %379 = sbr.rel (%p377) target = $region129
        $region126: #{bev_segm_head_forward.1} parent=121 // loop_body
          %v383 = vld [vmem:[%s381] sm:%s374]
          %384 = vst [vmem:[%s382] sm:%s374] %v383
          %v385 = vld [vmem:[%s381 + $0x8] sm:%s374]
          %386 = vst [vmem:[%s382 + $0x4] sm:%s374] %v385
        $region127: #{bev_segm_head_forward.1} parent=121 // loop_footer
          %s380 = sadd.s32 1, %s376
        $region128: #{bev_segm_head_forward.1} parent=121 // loop_footer_branch
          %375 = sbr.rel target = $region124
        $region129: #{bev_segm_head_forward.1} parent=121 // loop_exit
          _
      $region122: #{bev_segm_head_forward.1} parent=39 // pred_fallthru
        _
      // Predicated region
      $region148: #{bev_segm_head_forward.1} parent=39 // pred_check
        _
      $region149: #{bev_segm_head_forward.1} parent=39 // pred_check_branch
        %420 = sbr.rel (0) target = $region151
      $region150: #{bev_segm_head_forward.1} parent=39 // pred_region
        %421 = vsyncadd %s365, 128
      $region151: #{bev_segm_head_forward.1} parent=39 // pred_fallthru
        _
      %s422 = smul.u32 4, 2
      %s423 = smul.u32 %s422, 1
      %s424 = sshll.u32 %s423, 4
      %425 = dma.done [#allocation4], %s424
      %s426 = sshll.u32 %s423, 4
      %427 = dma.done %s302, %s426
      %s428 = sshll.u32 %s423, 4
      %429 = dma.done %s365, %s428
      %p430 = scmp.eq.s32.totalorder %s22, 0
      // Predicated region
      $region152: #{bev_segm_head_forward.1} parent=39 // pred_check
        %p431 = pneg %p430
      $region153: #{bev_segm_head_forward.1} parent=39 // pred_check_branch
        %433 = sbr.rel (%p431) target = $region155
      $region154: #{bev_segm_head_forward.1} parent=39 // pred_region
        %434 = vst [vmem:[#allocation2] sm:$0xff] 0
      $region155: #{bev_segm_head_forward.1} parent=39 // pred_fallthru
        _
      %p435 = scmp.eq.s32.totalorder %s22, 1
      // Predicated region
      $region156: #{bev_segm_head_forward.1} parent=39 // pred_check
        %p436 = pneg %p435
      $region157: #{bev_segm_head_forward.1} parent=39 // pred_check_branch
        %438 = sbr.rel (%p436) target = $region159
      $region158: #{bev_segm_head_forward.1} parent=39 // pred_region
        %439 = vst [vmem:[#allocation2 + $0x10] sm:$0xff] 0
      $region159: #{bev_segm_head_forward.1} parent=39 // pred_fallthru
        _
      %v440 = vld [vmem:[%s0] sm:$0x1]
      %v441 = vld [vmem:[#allocation2] sm:$0xff]
      %v442 = vld [vmem:[#allocation2 + $0x8] sm:$0xff]
      %v444 = vpack.i.b16 %v440, %v440
      %v446 = vlaneseq
      %v447 = vshrl.u32 %v446, 7
      %v448 = vsub.s32 0, %v447
      %v449 = vrot.slane %v444, %v448
      %451 = vrot.lane.b32.xlu0 %v449, 111
      %v452 = vpop.permute.xlu0 %451
      %v454 = vmul.bf16 %v441, %v452
      %v455 = vmul.bf16 %v442, %v452
      %458 = vrot.lane.b32.xlu0 %v454, 17
      %v459 = vpop.permute.xlu0 %458
      %460 = vrot.lane.b32.xlu0 %v455, 17
      %v461 = vpop.permute.xlu0 %460
      %vm462 = vcmask 138240
      %v463 = vsel %vm462, %v459, %v461
      %465 = vst [vmem:[#allocation3] sm:$0xff] %v463
      %v466 = vld [vmem:[#allocation2] sm:$0xff]
      %v467 = vld [vmem:[#allocation2 + $0x8] sm:$0xff]
      %470 = vrot.lane.b32.xlu0 %v466, 16
      %v471 = vpop.permute.xlu0 %470
      %472 = vrot.lane.b32.xlu0 %v467, 16
      %v473 = vpop.permute.xlu0 %472
      %vm474 = vcmask 130048
      %v475 = vsel %vm474, %v471, %v473
      %477 = vst [vmem:[#allocation3 + $0x8] sm:$0xff] %v475
      %v478 = vld [vmem:[#allocation2] sm:$0xff]
      %v479 = vld [vmem:[#allocation2 + $0x8] sm:$0xff]
      %v480 = vshrl.u32 %v440, 16
      %v481 = vpack.i.b16 %v480, %v480
      %v483 = vlaneseq
      %v484 = vshrl.u32 %v483, 7
      %v485 = vsub.s32 0, %v484
      %v486 = vrot.slane %v481, %v485
      %488 = vrot.lane.b32.xlu0 %v486, 113
      %v489 = vpop.permute.xlu0 %488
      %v491 = vmul.bf16 %v478, %v489
      %v492 = vmul.bf16 %v479, %v489
      %495 = vrot.lane.b32.xlu0 %v491, 15
      %v496 = vpop.permute.xlu0 %495
      %497 = vrot.lane.b32.xlu0 %v492, 15
      %v498 = vpop.permute.xlu0 %497
      %vm499 = vcmask 121856
      %v500 = vsel %vm499, %v496, %v498
      %502 = vst [vmem:[#allocation3 + $0x10] sm:$0xff] %v500
      %v503 = vld [vmem:[#allocation2] sm:$0xff]
      %v504 = vld [vmem:[#allocation2 + $0x8] sm:$0xff]
      %505 = vrot.lane.b32.xlu0 %v449, 127
      %v506 = vpop.permute.xlu0 %505
      %v508 = vmul.bf16 %v503, %v506
      %v509 = vmul.bf16 %v504, %v506
      %512 = vrot.lane.b32.xlu0 %v508, 1
      %v513 = vpop.permute.xlu0 %512
      %514 = vrot.lane.b32.xlu0 %v509, 1
      %v515 = vpop.permute.xlu0 %514
      %vm516 = vcmask 7168
      %v517 = vsel %vm516, %v513, %v515
      %519 = vst [vmem:[#allocation3 + $0x18] sm:$0xff] %v517
      %v520 = vld [vmem:[#allocation2 + $0x8] sm:$0xff]
      %521 = vst [vmem:[#allocation3 + $0x20] sm:$0xff] %v520
      %v522 = vld [vmem:[#allocation2 + $0x8] sm:$0xff]
      %v523 = vld [vmem:[#allocation2 + $0x10] sm:$0xff]
      %524 = vrot.lane.b32.xlu0 %v486, 1
      %v525 = vpop.permute.xlu0 %524
      %v527 = vmul.bf16 %v522, %v525
      %v528 = vmul.bf16 %v523, %v525
      %531 = vrot.lane.b32.xlu0 %v527, 127
      %v532 = vpop.permute.xlu0 %531
      %533 = vrot.lane.b32.xlu0 %v528, 127
      %v534 = vpop.permute.xlu0 %533
      %vm535 = vcmask 1039360
      %v536 = vsel %vm535, %v532, %v534
      %538 = vst [vmem:[#allocation3 + $0x28] sm:$0xff] %v536
      %v539 = vld [vmem:[#allocation2 + $0x8] sm:$0xff]
      %v540 = vld [vmem:[#allocation2 + $0x10] sm:$0xff]
      %541 = vrot.lane.b32.xlu0 %v449, 15
      %v542 = vpop.permute.xlu0 %541
      %v544 = vmul.bf16 %v539, %v542
      %v545 = vmul.bf16 %v540, %v542
      %548 = vrot.lane.b32.xlu0 %v544, 113
      %v549 = vpop.permute.xlu0 %548
      %550 = vrot.lane.b32.xlu0 %v545, 113
      %v551 = vpop.permute.xlu0 %550
      %vm552 = vcmask 924672
      %v553 = vsel %vm552, %v549, %v551
      %555 = vst [vmem:[#allocation3 + $0x30] sm:$0xff] %v553
      %v556 = vld [vmem:[#allocation2 + $0x8] sm:$0xff]
      %v557 = vld [vmem:[#allocation2 + $0x10] sm:$0xff]
      %560 = vrot.lane.b32.xlu0 %v556, 112
      %v561 = vpop.permute.xlu0 %560
      %562 = vrot.lane.b32.xlu0 %v557, 112
      %v563 = vpop.permute.xlu0 %562
      %vm564 = vcmask 916480
      %v565 = vsel %vm564, %v561, %v563
      %567 = vst [vmem:[#allocation3 + $0x38] sm:$0xff] %v565
      %v568 = vld [vmem:[#allocation2 + $0x8] sm:$0xff]
      %v569 = vld [vmem:[#allocation2 + $0x10] sm:$0xff]
      %570 = vrot.lane.b32.xlu0 %v486, 17
      %v571 = vpop.permute.xlu0 %570
      %v573 = vmul.bf16 %v568, %v571
      %v574 = vmul.bf16 %v569, %v571
      %577 = vrot.lane.b32.xlu0 %v573, 111
      %v578 = vpop.permute.xlu0 %577
      %579 = vrot.lane.b32.xlu0 %v574, 111
      %v580 = vpop.permute.xlu0 %579
      %vm581 = vcmask 908288
      %v582 = vsel %vm581, %v578, %v580
      %584 = vst [vmem:[#allocation3 + $0x40] sm:$0xff] %v582
      %v585 = vld [vmem:[%s1] sm:$0xff]
      %v586 = vld [vmem:[%s1 + $0x8] sm:$0xff]
      %v587 = vld [vmem:[#allocation3] sm:$0xff]
      %v588 = vld [vmem:[#allocation3 + $0x8] sm:$0xff]
      %v589 = vld [vmem:[#allocation3 + $0x10] sm:$0xff]
      %v590 = vld [vmem:[#allocation3 + $0x18] sm:$0xff]
      %v591 = vld [vmem:[#allocation3 + $0x20] sm:$0xff]
      %v592 = vld [vmem:[#allocation3 + $0x28] sm:$0xff]
      %v593 = vld [vmem:[#allocation3 + $0x30] sm:$0xff]
      %v594 = vld [vmem:[#allocation3 + $0x38] sm:$0xff]
      %v595 = vld [vmem:[#allocation3 + $0x40] sm:$0xff]
      %v596 = vld [vmem:[%s2] sm:$0xff]
      %v597 = vld [vmem:[%s2 + $0x8] sm:$0xff]
      %599 = vset.pattern.permute.xlu0 0
      %600 = vperm.xlu0 %599, %v596
      %v601 = vpop.permute.xlu0 %600
      %604 = vset.pattern.permute.xlu0 0
      %605 = vperm.xlu0 %604, %v597
      %v606 = vpop.permute.xlu0 %605
      %v610 = vunpack.c.l.b16 %v585
      %v611 = vunpack.c.h.b16 %v585
      %v612 = vunpack.c.l.b16 %v586
      %v613 = vunpack.c.h.b16 %v586
      %v614 = vpack.c.b16 %v612, %v610
      %v615 = vpack.c.b16 %v613, %v611
      %vm617 = vcmask 130048
      %v619 = vsel %vm617, %v615, 0
      %621 = vmatprep.subr.bf16.mxu0 0
      %622 = vmatpush1.bf16.msra.mxu0 %v587
      %623 = vmatprep.subr.bf16.mxu0 0
      %624 = vmatpush1.bf16.msra.mxu0 %v588
      %625 = vmatprep.subr.bf16.mxu0 0
      %626 = vmatpush1.bf16.msra.mxu0 %v589
      %627 = vmatprep.subr.bf16.mxu0 0
      %628 = vmatpush1.bf16.msra.mxu0 %v590
      %629 = vmatprep.subr.bf16.mxu0 0
      %630 = vmatpush1.bf16.msra.mxu0 %v591
      %631 = vmatprep.subr.bf16.mxu0 0
      %632 = vmatpush1.bf16.msra.mxu0 %v592
      %633 = vmatprep.subr.bf16.mxu0 0
      %634 = vmatpush1.bf16.msra.mxu0 %v593
      %635 = vmatprep.subr.bf16.mxu0 0
      %636 = vmatpush1.bf16.msra.mxu0 %v594
      %637 = vmatprep.subr.bf16.mxu0 0
      %638 = vmatpush1.bf16.msra.mxu0 %v595
      %639 = vmatprep.subr.bf16.mxu0 0
      %640 = vmatpush1.bf16.msra.mxu0 0
      %641 = vmatprep.subr.bf16.mxu0 0
      %642 = vmatpush1.bf16.msra.mxu0 0
      %643 = vmatprep.subr.bf16.mxu0 0
      %644 = vmatpush1.bf16.msra.mxu0 0
      %645 = vmatprep.subr.bf16.mxu0 0
      %646 = vmatpush1.bf16.msra.mxu0 0
      %647 = vmatprep.subr.bf16.mxu0 0
      %648 = vmatpush1.bf16.msra.mxu0 0
      %649 = vmatprep.subr.bf16.mxu0 0
      %650 = vmatpush1.bf16.msra.mxu0 0
      %651 = vmatprep.subr.bf16.mxu0 0
      %652 = vmatpush1.bf16.msra.mxu0 0
      %653 = vmatprep.mubr.bf16.mxu0 %v619
      %654 = vmatmul.mubr.bf16.gmra.mrb[0].mxu0 %v614
      %v655 = vpop.f32.mrb[0].mxu0
      %v656 = vadd.f32 %v601, %v655
      %v657 = vpop.f32.mrb[0].mxu0
      %v658 = vpop.f32.mrb[0].mxu0
      %v659 = vadd.f32 %v606, %v658
      %v660 = vpop.f32.mrb[0].mxu0
      %661 = vdwg.mxu0
      %v662 = vmax.f32 %v656, 0.0
      %v663 = vmax.f32 %v659, 0.0
      %v664 = vld [vmem:[%s3] sm:$0x3]
      %v665 = vpack.c.bf16 %v663, %v662
      %v666 = vld [vmem:[%s4] sm:$0x7]
      %668 = vset.pattern.permute.xlu0 0
      %669 = vperm.xlu0 %668, %v666
      %v670 = vpop.permute.xlu0 %669
      %v673 = vsel %vm617, %v664, 0
      %675 = vmatprep.subr.bf16.mxu0 0
      %676 = vmatpush1.bf16.msra.mxu0 %v665
      %677 = vmatprep.subr.bf16.mxu0 0
      %678 = vmatpush1.bf16.msra.mxu0 0
      %679 = vmatprep.subr.bf16.mxu0 0
      %680 = vmatpush1.bf16.msra.mxu0 0
      %681 = vmatprep.subr.bf16.mxu0 0
      %682 = vmatpush1.bf16.msra.mxu0 0
      %683 = vmatprep.subr.bf16.mxu0 0
      %684 = vmatpush1.bf16.msra.mxu0 0
      %685 = vmatprep.subr.bf16.mxu0 0
      %686 = vmatpush1.bf16.msra.mxu0 0
      %687 = vmatprep.subr.bf16.mxu0 0
      %688 = vmatpush1.bf16.msra.mxu0 0
      %689 = vmatprep.subr.bf16.mxu0 0
      %690 = vmatpush1.bf16.msra.mxu0 0
      %691 = vmatprep.subr.bf16.mxu0 0
      %692 = vmatpush1.bf16.msra.mxu0 0
      %693 = vmatprep.subr.bf16.mxu0 0
      %694 = vmatpush1.bf16.msra.mxu0 0
      %695 = vmatprep.subr.bf16.mxu0 0
      %696 = vmatpush1.bf16.msra.mxu0 0
      %697 = vmatprep.subr.bf16.mxu0 0
      %698 = vmatpush1.bf16.msra.mxu0 0
      %699 = vmatprep.subr.bf16.mxu0 0
      %700 = vmatpush1.bf16.msra.mxu0 0
      %701 = vmatprep.subr.bf16.mxu0 0
      %702 = vmatpush1.bf16.msra.mxu0 0
      %703 = vmatprep.subr.bf16.mxu0 0
      %704 = vmatpush1.bf16.msra.mxu0 0
      %705 = vmatprep.subr.bf16.mxu0 0
      %706 = vmatpush1.bf16.msra.mxu0 0
      %707 = vmatprep.mubr.bf16.mxu0 0
      %708 = vmatmul.mubr.bf16.gmra.mrb[0].mxu0 %v673
      %v709 = vpop.f32.mrb[0].mxu0
      %v710 = vadd.f32 %v670, %v709
      %v711 = vpop.f32.mrb[0].mxu0
      %v712 = vpop.f32.mrb[0].mxu0
      %v713 = vpop.f32.mrb[0].mxu0
      %714 = vdwg.mxu0
      %715 = vst [vmem:[%s225] sm:$0x7] %v710
      %p716 = scmp.lt.s32.totalorder %s21, 1
      %s717 = scalar_select %p716, %s21, 1
      %p718 = scmp.lt.s32.totalorder %s22, 1
      %s719 = scalar_select %p718, %s22, 1
      %s720 = smul.addr %s717, 2
      %s721 = sadd.s32 %s719, %s720
      %s722 = smul.addr %s721, 4
      %s723 = scalar_lea.vmem %s6, %s722
      // Predicated region
      $region160: #{bev_segm_head_forward.1} parent=39 // pred_check
        %p724 = pneg %p154
      $region161: #{bev_segm_head_forward.1} parent=39 // pred_check_branch
        %726 = sbr.rel (%p724) target = $region163
      $region162: #{bev_segm_head_forward.1} parent=39 // pred_region
        _
      $region163: #{bev_segm_head_forward.1} parent=39 // pred_fallthru
        _
    $region40: #{bev_segm_head_forward.1} parent=5 // pred_fallthru
      _
    %p727 = scmp.le.s32.totalorder 2, %s12
    // Predicated region
    $region164: #{bev_segm_head_forward.1} parent=5 // pred_check
      %p728 = pneg %p727
    $region165: #{bev_segm_head_forward.1} parent=5 // pred_check_branch
      %730 = sbr.rel (%p728) target = $region167
    $region166: #{bev_segm_head_forward.1} parent=5 // pred_region
      %s731 = ssub.s32 %s12, 2
      // Predicated region
      $region168: #{bev_segm_head_forward.1} parent=166 // pred_check
        %p732 = pneg %p160
      $region169: #{bev_segm_head_forward.1} parent=166 // pred_check_branch
        %734 = sbr.rel (%p732) target = $region171
      $region170: #{bev_segm_head_forward.1} parent=166 // pred_region
        %p735 = scmp.lt.s32.totalorder %s23, 1
        %s736 = scalar_select %p735, %s23, 1
        %p737 = scmp.lt.s32.totalorder %s24, 1
        %s738 = scalar_select %p737, %s24, 1
        %s739 = smul.addr %s736, 2
        %s740 = sadd.s32 %s738, %s739
        %s741 = smul.addr %s740, 4
        %s742 = scalar_lea.vmem %s6, %s741
      $region171: #{bev_segm_head_forward.1} parent=166 // pred_fallthru
        _
    $region167: #{bev_segm_head_forward.1} parent=5 // pred_fallthru
      _
  $region6: #{bev_segm_head_forward.1} parent=0 // loop_footer
    %s16 = sadd.s32 1, %s12
  $region7: #{bev_segm_head_forward.1} parent=0 // loop_footer_branch
    %11 = sbr.rel target = $region3
  $region8: #{bev_segm_head_forward.1} parent=0 // loop_exit
    _
  %743 = vsyncmov [#allocation4]
  %s744 = vpop.sfrf %743
  %p745 = scmp.eq.s32.totalorder %s744, 0
  %p746 = pneg %p745
  %748 = shalt.err (%p746)
  %s749 = scalar_lea.sflag [#allocation4], 1
  %750 = vsyncmov %s749
  %s751 = vpop.sfrf %750
  %p752 = scmp.eq.s32.totalorder %s751, 0
  %p753 = pneg %p752
  %755 = shalt.err (%p753)
  %s756 = scalar_lea.sflag [#allocation4], 2
  %757 = vsyncmov %s756
  %s758 = vpop.sfrf %757
  %p759 = scmp.eq.s32.totalorder %s758, 0
  %p760 = pneg %p759
  %762 = shalt.err (%p760)

</llo_original>
